<compile_context>
chip_gen: v6e
topology: v6e:2x2x1
jax: 0.10.0
libtpu: 0.0.40
codegen_flags: <defaults>
</compile_context>

<pallas_src>
import functools
import numpy as np
import jax
import jax.numpy as jnp
from jax.experimental import pallas as pl
from jax.experimental.pallas import tpu as pltpu

GUIDANCE_SCALE = 100.0


# ----------------------------------------------------------------------------
# Scheduler table (DDPM "squaredcos_cap_v2", 1000 steps) — deterministic glue.
# ----------------------------------------------------------------------------
def make_alphas_cumprod(num_steps: int = 1000) -> jnp.ndarray:
    def alpha_bar(t):
        return np.cos((t + 0.008) / 1.008 * np.pi / 2.0) ** 2
    ts = np.arange(num_steps, dtype=np.float64)
    betas = np.minimum(1.0 - alpha_bar((ts + 1) / num_steps) / alpha_bar(ts / num_steps), 0.999)
    alphas_cumprod = np.cumprod(1.0 - betas)
    return jnp.asarray(alphas_cumprod, dtype=jnp.float32)


def _choose_row_tile(rows: int, max_rows: int):
    """Return (row_tile, padded_rows, k_steps) for the per-sample rows axis.

    row_tile is a multiple of 8 and <= max_rows; padded_rows = k_steps*row_tile
    >= rows.  Picks the fewest grid steps first, then the least padding — it
    never degrades to tiny 8-row tiles for awkward row counts.
    """
    max_rows = max(8, (max_rows // 8) * 8)
    r8 = -(-rows // 8) * 8
    if r8 <= max_rows:
        return r8, r8, 1
    best_key, best = None, None
    for t in range(max_rows, 7, -8):
        steps = -(-rows // t)
        pad = steps * t - rows
        key = (steps, pad, -t)
        if best_key is None or key < best_key:
            best_key, best = key, (t, steps)
    t, steps = best
    return t, t * steps, steps


# ----------------------------------------------------------------------------
# Kernel 1: q-sample / add_noise (prepare_intermediate_images core).
# Lane-dense (row_tile, 128) blocks; per-sample scalars read from SMEM.
# ----------------------------------------------------------------------------
def add_noise_kernel(sa_ref, s1ma_ref, img_ref, eps_ref, out_ref):
    b = pl.program_id(0)
    out_ref[...] = sa_ref[b] * img_ref[...] + s1ma_ref[b] * eps_ref[...]


def add_noise_pallas(images, eps, sqrt_a, sqrt_1ma, *,
                     max_rows_per_step=4096, vmem_limit_bytes=32 << 20):
    b, c, h, w = images.shape
    chw = c * h * w
    assert chw % 128 == 0, "C*H*W must be a multiple of 128 for lane-dense layout"
    rows = chw // 128
    row_tile, padded_rows, k_steps = _choose_row_tile(rows, max_rows_per_step)

    img_v = images.astype(jnp.float32).reshape(b, rows, 128)
    eps_v = eps.astype(jnp.float32).reshape(b, rows, 128)
    if padded_rows != rows:
        pad = padded_rows - rows
        img_v = jnp.pad(img_v, ((0, 0), (0, pad), (0, 0)))
        eps_v = jnp.pad(eps_v, ((0, 0), (0, pad), (0, 0)))

    data_spec = pl.BlockSpec((None, row_tile, 128), lambda bi, k, sa, s1: (bi, k, 0))

    out = pl.pallas_call(
        add_noise_kernel,
        out_shape=jax.ShapeDtypeStruct((b, padded_rows, 128), jnp.float32),
        grid_spec=pltpu.PrefetchScalarGridSpec(
            num_scalar_prefetch=2,            # sqrt_a, sqrt_1ma -> SMEM scalars
            grid=(b, k_steps),
            in_specs=[data_spec, data_spec],
            out_specs=data_spec,
        ),
        compiler_params=pltpu.CompilerParams(
            dimension_semantics=("parallel", "arbitrary"),
            vmem_limit_bytes=vmem_limit_bytes,
        ),
    )(sqrt_a.astype(jnp.float32), sqrt_1ma.astype(jnp.float32), img_v, eps_v)

    if padded_rows != rows:
        out = out[:, :rows, :]
    return out.reshape(b, c, h, w)


# ----------------------------------------------------------------------------
# Kernel 2: merged CFG + SDS reduction for BOTH branches (init, target),
# reading the un-split UNet output directly.
#   noise_pred = uncond + g*(text - uncond)
#   grad       = nan_to_num(w * (noise_pred - eps), 0, 0, 0)
#   loss_br    = (grad * images).sum(channel).mean()
# Grid = (branch, sample, row_tiles).  The uncond/text samples and the
# variance-channel drop are selected purely by index_maps on the reshaped
# noise_pred view (sample, {mean,var}, rows, 128); w(t) comes from SMEM and is
# applied once per tile, keeping the per-vreg VALU chain short.
# ----------------------------------------------------------------------------
def sds_kernel(w_ref, unc_ref, txt_ref, eps_ref, img_ref, out_ref):
    br = pl.program_id(0)
    j = pl.program_id(1)
    k = pl.program_id(2)

    @pl.when((j == 0) & (k == 0))
    def _():
        out_ref[...] = jnp.zeros_like(out_ref)

    unc = unc_ref[...]
    txt = txt_ref[...]
    # CFG combine then subtract eps; w is hoisted out (exact since 0 <= w <= 1).
    d = unc + GUIDANCE_SCALE * (txt - unc) - eps_ref[...]
    # torch.nan_to_num(grad, 0.0, 0.0, 0.0) -> single finite-select.
    d = jnp.where(jnp.isfinite(d), d, 0.0)
    prod = d * img_ref[...]                                  # (row_tile, 128)
    partial = jnp.sum(prod.reshape(-1, 8, 128), axis=0)      # fold to (8, 128)
    w = w_ref[br * pl.num_programs(1) + j]                   # SMEM scalar w(t)
    out_ref[...] += w * partial


def sds_loss_pallas(noise_pred, eps, images, w, half, *,
                    max_rows_per_step=4096, vmem_limit_bytes=40 << 20):
    # noise_pred: (4*half, 2*C, H, W) ordered [init_unc | init_txt | tgt_unc | tgt_txt]
    # eps/images: (2*half, C, H, W) ordered [init | target];  w: (2*half,)
    b2, c, h, wd = images.shape
    assert b2 == 2 * half
    chw = c * h * wd
    assert chw % 128 == 0, "C*H*W must be a multiple of 128 for lane-dense layout"
    rows = chw // 128
    row_tile, padded_rows, k_steps = _choose_row_tile(rows, max_rows_per_step)

    # Free (contiguous) reshapes — no stack / chunk / channel-slice copies.
    np_v = noise_pred.astype(jnp.float32).reshape(4 * half, 2, rows, 128)
    eps_v = eps.astype(jnp.float32).reshape(2 * half, rows, 128)
    img_v = images.astype(jnp.float32).reshape(2 * half, rows, 128)
    if padded_rows != rows:
        pad = padded_rows - rows          # zero rows contribute 0 to the sum
        np_v = jnp.pad(np_v, ((0, 0), (0, 0), (0, pad), (0, 0)))
        eps_v = jnp.pad(eps_v, ((0, 0), (0, pad), (0, 0)))
        img_v = jnp.pad(img_v, ((0, 0), (0, pad), (0, 0)))

    # Branch br, sample j: uncond sample = br*2*half + j, text = br*2*half + half + j.
    # Second axis index 0 selects the mean channels (variance channels never read).
    unc_spec = pl.BlockSpec((None, None, row_tile, 128),
                            lambda br, j, k, w_r: (br * 2 * half + j, 0, k, 0))
    txt_spec = pl.BlockSpec((None, None, row_tile, 128),
                            lambda br, j, k, w_r: (br * 2 * half + half + j, 0, k, 0))
    data_spec = pl.BlockSpec((None, row_tile, 128),
                             lambda br, j, k, w_r: (br * half + j, k, 0))

    partial = pl.pallas_call(
        sds_kernel,
        out_shape=jax.ShapeDtypeStruct((2, 8, 128), jnp.float32),
        grid_spec=pltpu.PrefetchScalarGridSpec(
            num_scalar_prefetch=1,            # w(t) per sample -> SMEM
            grid=(2, half, k_steps),
            in_specs=[unc_spec, txt_spec, data_spec, data_spec],
            out_specs=pl.BlockSpec((None, 8, 128), lambda br, j, k, w_r: (br, 0, 0)),
        ),
        compiler_params=pltpu.CompilerParams(
            # branch axis parallel (one branch per TC on v7x); reduction axes last.
            dimension_semantics=("parallel", "arbitrary", "arbitrary"),
            vmem_limit_bytes=vmem_limit_bytes,
        ),
    )(w.astype(jnp.float32), np_v, np_v, eps_v, img_v)

    # .sum(1).mean() per branch == total_sum / (half * H * W)
    losses = jnp.sum(partial, axis=(1, 2)) / jnp.float32(half * h * wd)
    return losses[0], losses[1]


# ----------------------------------------------------------------------------
# Forward: mirrors IFLossSinglePass.forward.
# ----------------------------------------------------------------------------
@functools.partial(jax.jit, static_argnames=("sample_size",))
def if_loss_single_pass(x_aug, key, sample_size=32):
    c = x_aug.shape[1]

    # self.transform = rotate 180 degrees, then cat with original.
    x_rot = x_aug[..., ::-1, ::-1]
    x_aug = jnp.concatenate([x_aug, x_rot], axis=0)
    batch_size = x_aug.shape[0]
    half = batch_size // 2

    # interpolate(x_aug, size=sample_size, mode='bilinear', antialias=True)
    images = jax.image.resize(
        x_aug, (batch_size, c, sample_size, sample_size),
        method="bilinear", antialias=True).astype(jnp.float32)

    k_t, k_eps, k_np = jax.random.split(key, 3)
    timestep = jax.random.randint(k_t, (batch_size,), 50, 950)
    eps = jax.random.normal(k_eps, images.shape, jnp.float32)

    alphas = make_alphas_cumprod()          # alphas_cumprod
    sigmas = 1.0 - alphas                   # 1 - alphas_cumprod
    a_t = alphas[timestep]
    sqrt_a = jnp.sqrt(a_t)
    sqrt_1ma = jnp.sqrt(1.0 - a_t)

    # prepare_intermediate_images -> q_sample (Pallas kernel 1)
    intermediate_images = add_noise_pallas(images, eps, sqrt_a, sqrt_1ma)

    # TODO(synk): UNet2DConditionModel(z_in, t, encoder_hidden_states) is not
    # translatable to a Pallas kernel here; a deterministic surrogate mixing
    # random features with the noised images stands in for noise_pred.
    # (scheduler.scale_model_input is identity for DDPM.)
    z_dep = jnp.concatenate(
        [intermediate_images[:half], intermediate_images[:half],
         intermediate_images[half:], intermediate_images[half:]], axis=0)
    rnd = jax.random.normal(
        k_np, (2 * batch_size, 2 * c, sample_size, sample_size), jnp.float32)
    noise_pred = rnd + 0.1 * jnp.concatenate([z_dep, z_dep], axis=1)

    # w(t) per sample, ordered [init half | target half] — matches the grid.
    w_flat = (sqrt_a * sigmas[timestep]).astype(jnp.float32)

    # Kernel 2 consumes the un-split noise_pred / eps / images directly.
    sds_loss_init, sds_loss_target = sds_loss_pallas(
        noise_pred, eps, images, w_flat, half)
    return sds_loss_init, sds_loss_target


if __name__ == "__main__":
    key = jax.random.PRNGKey(0)
    kx, kf = jax.random.split(key)
    # small image batch: 2 RGB images of 16x16, resized to sample_size=32 inside
    x = jax.random.uniform(kx, (2, 3, 16, 16), dtype=jnp.float32)
    loss_init, loss_target = if_loss_single_pass(x, kf, sample_size=32)
    jax.block_until_ready((loss_init, loss_target))
    assert jnp.isfinite(loss_init) and jnp.isfinite(loss_target)
    print("KERNEL_OK")
</pallas_src>

<mosaic_0001>
module attributes {stable_mosaic.version = 11 : i64} {
  func.func @add_noise_kernel(%arg0: i32, %arg1: i32, %arg2: memref<4xf32, #tpu.memory_space<smem>>, %arg3: memref<4xf32, #tpu.memory_space<smem>>, %arg4: memref<1x24x128xf32, #tpu.memory_space<vmem>>, %arg5: memref<1x24x128xf32, #tpu.memory_space<vmem>>, %arg6: memref<1x24x128xf32, #tpu.memory_space<vmem>>) attributes {dimension_semantics = [#tpu.dimension_semantics<parallel>, #tpu.dimension_semantics<arbitrary>], iteration_bounds = array<i64: 4, 1>, scalar_prefetch = 2 : i64, scratch_operands = 0 : i64, tpu.core_type = #tpu.core_type<tc>, window_params = [{transform_indices = @transform_0, window_bounds = array<i64: 1, 24, 128>}, {transform_indices = @transform_1, window_bounds = array<i64: 1, 24, 128>}, {transform_indices = @transform_2, window_bounds = array<i64: 1, 24, 128>}]} {
    %0 = arith.index_cast %arg0 : i32 to index
    %1 = memref.load %arg2[%0] : memref<4xf32, #tpu.memory_space<smem>>
    %c0 = arith.constant 0 : index
    %c0_0 = arith.constant 0 : index
    %c0_1 = arith.constant 0 : index
    %2 = vector.load %arg4[%c0, %c0_0, %c0_1] : memref<1x24x128xf32, #tpu.memory_space<vmem>>, vector<1x24x128xf32>
    %3 = vector.shape_cast %2 : vector<1x24x128xf32> to vector<24x128xf32>
    %4 = vector.broadcast %1 : f32 to vector<24x128xf32>
    %5 = arith.mulf %4, %3 : vector<24x128xf32>
    %6 = arith.index_cast %arg0 : i32 to index
    %7 = memref.load %arg3[%6] : memref<4xf32, #tpu.memory_space<smem>>
    %c0_2 = arith.constant 0 : index
    %c0_3 = arith.constant 0 : index
    %c0_4 = arith.constant 0 : index
    %8 = vector.load %arg5[%c0_2, %c0_3, %c0_4] : memref<1x24x128xf32, #tpu.memory_space<vmem>>, vector<1x24x128xf32>
    %9 = vector.shape_cast %8 : vector<1x24x128xf32> to vector<24x128xf32>
    %10 = vector.broadcast %7 : f32 to vector<24x128xf32>
    %11 = arith.mulf %10, %9 : vector<24x128xf32>
    %12 = arith.addf %5, %11 : vector<24x128xf32>
    %c0_5 = arith.constant 0 : index
    %c0_6 = arith.constant 0 : index
    %c0_7 = arith.constant 0 : index
    %13 = vector.load %arg6[%c0_5, %c0_6, %c0_7] : memref<1x24x128xf32, #tpu.memory_space<vmem>>, vector<1x24x128xf32>
    %14 = vector.shape_cast %13 : vector<1x24x128xf32> to vector<24x128xf32>
    %15 = vector.shape_cast %12 : vector<24x128xf32> to vector<1x24x128xf32>
    tpu.vector_store %arg6[%c0_5, %c0_6, %c0_7], %15 {strides = array<i32>} : memref<1x24x128xf32, #tpu.memory_space<vmem>>, vector<1x24x128xf32>,
    return
  }
  func.func @transform_0(%arg0: i32, %arg1: i32, %arg2: memref<4xf32, #tpu.memory_space<smem>>, %arg3: memref<4xf32, #tpu.memory_space<smem>>) -> (i32, i32, i32) {
    %c0_i32 = arith.constant 0 : i32
    %c0_i32_0 = arith.constant 0 : i32
    return %arg0, %arg1, %c0_i32 : i32, i32, i32
  }
  func.func @transform_1(%arg0: i32, %arg1: i32, %arg2: memref<4xf32, #tpu.memory_space<smem>>, %arg3: memref<4xf32, #tpu.memory_space<smem>>) -> (i32, i32, i32) {
    %c0_i32 = arith.constant 0 : i32
    %c0_i32_0 = arith.constant 0 : i32
    return %arg0, %arg1, %c0_i32 : i32, i32, i32
  }
  func.func @transform_2(%arg0: i32, %arg1: i32, %arg2: memref<4xf32, #tpu.memory_space<smem>>, %arg3: memref<4xf32, #tpu.memory_space<smem>>) -> (i32, i32, i32) {
    %c0_i32 = arith.constant 0 : i32
    %c0_i32_0 = arith.constant 0 : i32
    return %arg0, %arg1, %c0_i32 : i32, i32, i32
  }
}

module attributes {stable_mosaic.version = 11 : i64} {
  func.func @sds_kernel(%arg0: i32, %arg1: i32, %arg2: i32, %arg3: memref<4xf32, #tpu.memory_space<smem>>, %arg4: memref<1x1x24x128xf32, #tpu.memory_space<vmem>>, %arg5: memref<1x1x24x128xf32, #tpu.memory_space<vmem>>, %arg6: memref<1x24x128xf32, #tpu.memory_space<vmem>>, %arg7: memref<1x24x128xf32, #tpu.memory_space<vmem>>, %arg8: memref<1x8x128xf32, #tpu.memory_space<vmem>>) attributes {dimension_semantics = [#tpu.dimension_semantics<parallel>, #tpu.dimension_semantics<arbitrary>, #tpu.dimension_semantics<arbitrary>], iteration_bounds = array<i64: 2, 2, 1>, scalar_prefetch = 1 : i64, scratch_operands = 0 : i64, tpu.core_type = #tpu.core_type<tc>, window_params = [{transform_indices = @transform_0, window_bounds = array<i64: 1, 1, 24, 128>}, {transform_indices = @transform_1, window_bounds = array<i64: 1, 1, 24, 128>}, {transform_indices = @transform_2, window_bounds = array<i64: 1, 24, 128>}, {transform_indices = @transform_3, window_bounds = array<i64: 1, 24, 128>}, {transform_indices = @transform_4, window_bounds = array<i64: 1, 8, 128>}]} {
    %c0_i32 = arith.constant 0 : i32
    %0 = arith.cmpi eq, %arg1, %c0_i32 : i32
    %c0_i32_0 = arith.constant 0 : i32
    %1 = arith.cmpi eq, %arg2, %c0_i32_0 : i32
    %2 = arith.andi %0, %1 : i1
    %3 = arith.extui %2 : i1 to i32
    %c0_i32_1 = arith.constant 0 : i32
    %4 = arith.cmpi ne, %3, %c0_i32_1 : i32
    scf.if %4 {
      %cst_24 = arith.constant 0.000000e+00 : f32
      %37 = vector.broadcast %cst_24 : f32 to vector<8x128xf32>
      %c0_25 = arith.constant 0 : index
      %c0_26 = arith.constant 0 : index
      %c0_27 = arith.constant 0 : index
      %38 = vector.load %arg8[%c0_25, %c0_26, %c0_27] : memref<1x8x128xf32, #tpu.memory_space<vmem>>, vector<1x8x128xf32>
      %39 = vector.shape_cast %38 : vector<1x8x128xf32> to vector<8x128xf32>
      %40 = vector.shape_cast %37 : vector<8x128xf32> to vector<1x8x128xf32>
      tpu.vector_store %arg8[%c0_25, %c0_26, %c0_27], %40 {strides = array<i32>} : memref<1x8x128xf32, #tpu.memory_space<vmem>>, vector<1x8x128xf32>,
    } else {
    }
    %c0 = arith.constant 0 : index
    %c0_2 = arith.constant 0 : index
    %c0_3 = arith.constant 0 : index
    %c0_4 = arith.constant 0 : index
    %5 = vector.load %arg4[%c0, %c0_2, %c0_3, %c0_4] : memref<1x1x24x128xf32, #tpu.memory_space<vmem>>, vector<1x1x24x128xf32>
    %6 = vector.shape_cast %5 : vector<1x1x24x128xf32> to vector<24x128xf32>
    %c0_5 = arith.constant 0 : index
    %c0_6 = arith.constant 0 : index
    %c0_7 = arith.constant 0 : index
    %c0_8 = arith.constant 0 : index
    %7 = vector.load %arg5[%c0_5, %c0_6, %c0_7, %c0_8] : memref<1x1x24x128xf32, #tpu.memory_space<vmem>>, vector<1x1x24x128xf32>
    %8 = vector.shape_cast %7 : vector<1x1x24x128xf32> to vector<24x128xf32>
    %9 = arith.subf %8, %6 : vector<24x128xf32>
    %cst = arith.constant 1.000000e+02 : f32
    %10 = vector.broadcast %cst : f32 to vector<24x128xf32>
    %11 = arith.mulf %10, %9 : vector<24x128xf32>
    %12 = arith.addf %6, %11 : vector<24x128xf32>
    %c0_9 = arith.constant 0 : index
    %c0_10 = arith.constant 0 : index
    %c0_11 = arith.constant 0 : index
    %13 = vector.load %arg6[%c0_9, %c0_10, %c0_11] : memref<1x24x128xf32, #tpu.memory_space<vmem>>, vector<1x24x128xf32>
    %14 = vector.shape_cast %13 : vector<1x24x128xf32> to vector<24x128xf32>
    %15 = arith.subf %12, %14 : vector<24x128xf32>
    %16 = tpu.weird %15 : vector<24x128xf32> -> vector<24x128xi1>
    %cst_12 = arith.constant dense<true> : vector<24x128xi1>
    %17 = arith.xori %16, %cst_12 : vector<24x128xi1>
    %cst_13 = arith.constant 0.000000e+00 : f32
    %18 = vector.broadcast %cst_13 : f32 to vector<24x128xf32>
    %19 = arith.select %17, %15, %18 : vector<24x128xi1>, vector<24x128xf32>
    %c0_14 = arith.constant 0 : index
    %c0_15 = arith.constant 0 : index
    %c0_16 = arith.constant 0 : index
    %20 = vector.load %arg7[%c0_14, %c0_15, %c0_16] : memref<1x24x128xf32, #tpu.memory_space<vmem>>, vector<1x24x128xf32>
    %21 = vector.shape_cast %20 : vector<1x24x128xf32> to vector<24x128xf32>
    %22 = arith.mulf %19, %21 : vector<24x128xf32>
    %23 = vector.shape_cast %22 : vector<24x128xf32> to vector<3x8x128xf32>
    %cst_17 = arith.constant dense<0.000000e+00> : vector<8x128xf32>
    %24 = vector.multi_reduction <add>, %23, %cst_17 [0] : vector<3x8x128xf32> to vector<8x128xf32>
    %c2_i32 = arith.constant 2 : i32
    %25 = arith.muli %arg0, %c2_i32 : i32
    %26 = arith.addi %25, %arg1 : i32
    %27 = arith.index_cast %26 : i32 to index
    %28 = memref.load %arg3[%27] : memref<4xf32, #tpu.memory_space<smem>>
    %c0_18 = arith.constant 0 : index
    %c0_19 = arith.constant 0 : index
    %c0_20 = arith.constant 0 : index
    %29 = vector.load %arg8[%c0_18, %c0_19, %c0_20] : memref<1x8x128xf32, #tpu.memory_space<vmem>>, vector<1x8x128xf32>
    %30 = vector.shape_cast %29 : vector<1x8x128xf32> to vector<8x128xf32>
    %31 = vector.broadcast %28 : f32 to vector<8x128xf32>
    %32 = arith.mulf %31, %24 : vector<8x128xf32>
    %33 = arith.addf %30, %32 : vector<8x128xf32>
    %c0_21 = arith.constant 0 : index
    %c0_22 = arith.constant 0 : index
    %c0_23 = arith.constant 0 : index
    %34 = vector.load %arg8[%c0_21, %c0_22, %c0_23] : memref<1x8x128xf32, #tpu.memory_space<vmem>>, vector<1x8x128xf32>
    %35 = vector.shape_cast %34 : vector<1x8x128xf32> to vector<8x128xf32>
    %36 = vector.shape_cast %33 : vector<8x128xf32> to vector<1x8x128xf32>
    tpu.vector_store %arg8[%c0_21, %c0_22, %c0_23], %36 {strides = array<i32>} : memref<1x8x128xf32, #tpu.memory_space<vmem>>, vector<1x8x128xf32>,
    return
  }
  func.func @transform_0(%arg0: i32, %arg1: i32, %arg2: i32, %arg3: memref<4xf32, #tpu.memory_space<smem>>) -> (i32, i32, i32, i32) {
    %c2_i32 = arith.constant 2 : i32
    %0 = arith.muli %arg0, %c2_i32 : i32
    %c2_i32_0 = arith.constant 2 : i32
    %1 = arith.muli %0, %c2_i32_0 : i32
    %2 = arith.addi %1, %arg1 : i32
    %c0_i32 = arith.constant 0 : i32
    %c0_i32_1 = arith.constant 0 : i32
    %c0_i32_2 = arith.constant 0 : i32
    return %2, %c0_i32, %arg2, %c0_i32_1 : i32, i32, i32, i32
  }
  func.func @transform_1(%arg0: i32, %arg1: i32, %arg2: i32, %arg3: memref<4xf32, #tpu.memory_space<smem>>) -> (i32, i32, i32, i32) {
    %c2_i32 = arith.constant 2 : i32
    %0 = arith.muli %arg0, %c2_i32 : i32
    %c2_i32_0 = arith.constant 2 : i32
    %1 = arith.muli %0, %c2_i32_0 : i32
    %c2_i32_1 = arith.constant 2 : i32
    %2 = arith.addi %1, %c2_i32_1 : i32
    %3 = arith.addi %2, %arg1 : i32
    %c0_i32 = arith.constant 0 : i32
    %c0_i32_2 = arith.constant 0 : i32
    %c0_i32_3 = arith.constant 0 : i32
    return %3, %c0_i32, %arg2, %c0_i32_2 : i32, i32, i32, i32
  }
  func.func @transform_2(%arg0: i32, %arg1: i32, %arg2: i32, %arg3: memref<4xf32, #tpu.memory_space<smem>>) -> (i32, i32, i32) {
    %c2_i32 = arith.constant 2 : i32
    %0 = arith.muli %arg0, %c2_i32 : i32
    %1 = arith.addi %0, %arg1 : i32
    %c0_i32 = arith.constant 0 : i32
    %c0_i32_0 = arith.constant 0 : i32
    return %1, %arg2, %c0_i32 : i32, i32, i32
  }
  func.func @transform_3(%arg0: i32, %arg1: i32, %arg2: i32, %arg3: memref<4xf32, #tpu.memory_space<smem>>) -> (i32, i32, i32) {
    %c2_i32 = arith.constant 2 : i32
    %0 = arith.muli %arg0, %c2_i32 : i32
    %1 = arith.addi %0, %arg1 : i32
    %c0_i32 = arith.constant 0 : i32
    %c0_i32_0 = arith.constant 0 : i32
    return %1, %arg2, %c0_i32 : i32, i32, i32
  }
  func.func @transform_4(%arg0: i32, %arg1: i32, %arg2: i32, %arg3: memref<4xf32, #tpu.memory_space<smem>>) -> (i32, i32, i32) {
    %c0_i32 = arith.constant 0 : i32
    %c0_i32_0 = arith.constant 0 : i32
    %c0_i32_1 = arith.constant 0 : i32
    return %arg0, %c0_i32, %c0_i32_0 : i32, i32, i32
  }
}

</mosaic_0001>

<llo_original>
// kernel: if_loss_single_pass.4
$region0: #{if_loss_single_pass.4}
  #allocation0 [shape = 'u32[]', space=smem, size = 0x4, offset = 0x4, fixed_abs, tag = 'smem constant byte address 0x4 - core index']
  #allocation1 [shape = 'u32[144,128]{1,0:T(1,128)}', space=vmem, size = 0x12000, scoped, tag = 'internal scratch']
  #allocation2 [shape = 's32[1]{0}', space=sflag, size = 0x4, scoped, tag = 'scoped memory for if_loss_single_pass.4']
  #allocation3 [shape = 'u8[512]{0}', space=smem, size = 0x200, scoped, tag = 'prefetched SMEM operand 0']
  #allocation4 [shape = 'u8[512]{0}', space=smem, size = 0x200, scoped, tag = 'prefetched SMEM operand 1']
  %s0 = inlined_call_operand.vmem [shape: f32[4], index: 0, kind: input, shape index: {}]
  %s1 = inlined_call_operand.vmem [shape: f32[4], index: 1, kind: input, shape index: {}]
  %s2 = inlined_call_operand.vmem [shape: f32[4,24,128], index: 2, kind: input, shape index: {}]
  %s3 = inlined_call_operand.vmem [shape: f32[4,24,128], index: 3, kind: input, shape index: {}]
  %s4 = inlined_call_operand.vmem [shape: f32[4,24,128], index: 4, kind: output, shape index: {}]
  %s5 = sld [smem:[#allocation0]]
  $region41: #{if_loss_single_pass.4} parent=0
    _
  %s7 = ssub.s32 1, %s5
  %s8 = scalar_select 0, %s7, %s5
  %s9 = sshll.u32 %s0, 4
  %s10 = int_to_ptr.vmem [resolvable:$true] %s9
  %12 = dma.vmem_to_smem %s10, 16, [#allocation3], [#allocation2]
  %s13 = sshll.u32 %s1, 4
  %s14 = int_to_ptr.vmem [resolvable:$true] %s13
  %16 = dma.vmem_to_smem %s14, 16, [#allocation4], [#allocation2]
  %17 = dma.done [#allocation2], 32
  %18 = sfence
  loop: start=0, step=1, limit=6
  $region2: #{if_loss_single_pass.4} parent=0 // loop_pre_header
    _
  $region3: #{if_loss_single_pass.4} parent=0 // loop_header
    %s20 = sphi 0, %s24
    %p21 = scmp.ge.s32.totalorder %s20, 6
    %s27 = sphi 0, %s39
    %s28 = sphi 0, %s35
    %s29 = sphi 0, %s27
    %s30 = sphi 0, %s28
    %s31 = sphi 0, %s29
    %s32 = sphi 0, %s30
    %s44 = sphi 0, %s46
    %s47 = sphi 0, %s44
    %s48 = sphi 0, %s47
    %s64 = sphi 0, %s48
    %s72 = sphi 0, %s74
    %s75 = sphi 0, %s72
    %s76 = sphi 0, %s75
    %s92 = sphi 0, %s76
    %s100 = sphi 0, %s102
    %s103 = sphi 0, %s100
    %s104 = sphi 0, %s103
    %s120 = sphi 0, %s104
  $region4: #{if_loss_single_pass.4} parent=0 // loop_header_branch
    %23 = sbr.rel (%p21) target = $region8
  $region5: #{if_loss_single_pass.4} parent=0 // loop_body
    %s25 = ssub.s32 %s20, 1
    %s26 = ssub.s32 %s20, 2
    %s33 = sadd.s32 1, %s28
    %p34 = scmp.ge.s32.totalorder %s33, 1
    %s35 = scalar_select %p34, 0, %s33
    %s36 = sadd.s32 1, %s27
    %s37 = scalar_select %p34, %s36, %s27
    %p38 = scmp.ge.s32.totalorder %s37, 4
    %s39 = scalar_select %p38, 0, %s37
    %s40 = ssub.s32 %s27, %s39
    %s41 = ssub.s32 %s28, %s35
    %s42 = sor.u32 %s40, %s41
    %p43 = scmp.eq.s32.totalorder %s42, 0
    %s45 = sadd.s32 %s44, 1
    %s46 = scalar_select %p43, %s44, %s45
    %p49 = pneg %p43
    %p50 = scmp.eq.s32.totalorder %s20, 3
    %p51 = por %p49, %p50
    %p52 = scmp.ne.s32.totalorder %s44, %s47
    %p53 = scmp.eq.s32.totalorder %s20, 0
    %p54 = por %p52, %p53
    %p55 = scmp.ne.s32.totalorder %s44, %s47
    %p56 = scmp.eq.s32.totalorder %s25, 3
    %p57 = por %p55, %p56
    %p58 = scmp.ne.s32.totalorder %s47, %s48
    %p59 = scmp.eq.s32.totalorder %s25, 0
    %p60 = por %p58, %p59
    %p61 = scmp.ne.s32.totalorder %s47, %s48
    %p62 = scmp.eq.s32.totalorder %s26, 3
    %p63 = por %p61, %p62
    %p65 = scmp.ne.s32.totalorder %s48, %s64
    %p66 = scmp.eq.s32.totalorder %s26, 0
    %p67 = por %p65, %p66
    %s68 = ssub.s32 %s27, %s39
    %s69 = ssub.s32 %s28, %s35
    %s70 = sor.u32 %s68, %s69
    %p71 = scmp.eq.s32.totalorder %s70, 0
    %s73 = sadd.s32 %s72, 1
    %s74 = scalar_select %p71, %s72, %s73
    %p77 = pneg %p71
    %p78 = scmp.eq.s32.totalorder %s20, 3
    %p79 = por %p77, %p78
    %p80 = scmp.ne.s32.totalorder %s72, %s75
    %p81 = scmp.eq.s32.totalorder %s20, 0
    %p82 = por %p80, %p81
    %p83 = scmp.ne.s32.totalorder %s72, %s75
    %p84 = scmp.eq.s32.totalorder %s25, 3
    %p85 = por %p83, %p84
    %p86 = scmp.ne.s32.totalorder %s75, %s76
    %p87 = scmp.eq.s32.totalorder %s25, 0
    %p88 = por %p86, %p87
    %p89 = scmp.ne.s32.totalorder %s75, %s76
    %p90 = scmp.eq.s32.totalorder %s26, 3
    %p91 = por %p89, %p90
    %p93 = scmp.ne.s32.totalorder %s76, %s92
    %p94 = scmp.eq.s32.totalorder %s26, 0
    %p95 = por %p93, %p94
    %s96 = ssub.s32 %s27, %s39
    %s97 = ssub.s32 %s28, %s35
    %s98 = sor.u32 %s96, %s97
    %p99 = scmp.eq.s32.totalorder %s98, 0
    %s101 = sadd.s32 %s100, 1
    %s102 = scalar_select %p99, %s100, %s101
    %p105 = pneg %p99
    %p106 = scmp.eq.s32.totalorder %s20, 3
    %p107 = por %p105, %p106
    %p108 = scmp.ne.s32.totalorder %s100, %s103
    %p109 = scmp.eq.s32.totalorder %s20, 0
    %p110 = por %p108, %p109
    %p111 = scmp.ne.s32.totalorder %s100, %s103
    %p112 = scmp.eq.s32.totalorder %s25, 3
    %p113 = por %p111, %p112
    %p114 = scmp.ne.s32.totalorder %s103, %s104
    %p115 = scmp.eq.s32.totalorder %s25, 0
    %p116 = por %p114, %p115
    %p117 = scmp.ne.s32.totalorder %s103, %s104
    %p118 = scmp.eq.s32.totalorder %s26, 3
    %p119 = por %p117, %p118
    %p121 = scmp.ne.s32.totalorder %s104, %s120
    %p122 = scmp.eq.s32.totalorder %s26, 0
    %p123 = por %p121, %p122
    %p124 = scmp.le.s32.totalorder 1, %s20
    %p125 = scmp.lt.s32.totalorder %s20, 5
    %p126 = pnand %p124, %p125
    %p127 = pneg %p126
    // Predicated region
    $region9: #{if_loss_single_pass.4} parent=5 // pred_check
      _
    $region10: #{if_loss_single_pass.4} parent=5 // pred_check_branch
      %129 = sbr.rel (%p126) target = $region12
    $region11: #{if_loss_single_pass.4} parent=5 // pred_region
      %s130 = ssub.s32 %s20, 1
    $region12: #{if_loss_single_pass.4} parent=5 // pred_fallthru
      _
    %p131 = scmp.lt.s32.totalorder %s20, 4
    // Predicated region
    $region13: #{if_loss_single_pass.4} parent=5 // pred_check
      %p132 = pneg %p131
    $region14: #{if_loss_single_pass.4} parent=5 // pred_check_branch
      %134 = sbr.rel (%p132) target = $region16
    $region15: #{if_loss_single_pass.4} parent=5 // pred_region
      // Predicated region
      $region17: #{if_loss_single_pass.4} parent=15 // pred_check
        %p135 = pneg %p54
      $region18: #{if_loss_single_pass.4} parent=15 // pred_check_branch
        %137 = sbr.rel (%p135) target = $region20
      $region19: #{if_loss_single_pass.4} parent=15 // pred_region
        %s138 = smul.u32 3, %s28
        %p139 = scmp.lt.s32.totalorder %s27, 3
        %s140 = scalar_select %p139, %s27, 3
        %p141 = scmp.lt.s32.totalorder %s138, 2
        %s142 = scalar_select %p141, %s138, 2
        %s143 = smul.addr %s140, 3
        %s144 = sadd.s32 %s142, %s143
        %s145 = smul.addr %s144, 8
        %s146 = scalar_lea.vmem %s2, %s145
        %s147 = smul.u32 3, %s28
      $region20: #{if_loss_single_pass.4} parent=15 // pred_fallthru
        _
      // Predicated region
      $region21: #{if_loss_single_pass.4} parent=15 // pred_check
        %p148 = pneg %p82
      $region22: #{if_loss_single_pass.4} parent=15 // pred_check_branch
        %150 = sbr.rel (%p148) target = $region24
      $region23: #{if_loss_single_pass.4} parent=15 // pred_region
        %s151 = smul.u32 3, %s28
        %p152 = scmp.lt.s32.totalorder %s27, 3
        %s153 = scalar_select %p152, %s27, 3
        %p154 = scmp.lt.s32.totalorder %s151, 2
        %s155 = scalar_select %p154, %s151, 2
        %s156 = smul.addr %s153, 3
        %s157 = sadd.s32 %s155, %s156
        %s158 = smul.addr %s157, 8
        %s159 = scalar_lea.vmem %s3, %s158
        %s160 = smul.u32 3, %s28
      $region24: #{if_loss_single_pass.4} parent=15 // pred_fallthru
        _
    $region16: #{if_loss_single_pass.4} parent=5 // pred_fallthru
      _
    %p161 = scmp.le.s32.totalorder 1, %s20
    %p162 = scmp.lt.s32.totalorder %s20, 5
    %p163 = pnand %p161, %p162
    %p164 = pneg %p163
    // Predicated region
    $region25: #{if_loss_single_pass.4} parent=5 // pred_check
      _
    $region26: #{if_loss_single_pass.4} parent=5 // pred_check_branch
      %166 = sbr.rel (%p163) target = $region28
    $region27: #{if_loss_single_pass.4} parent=5 // pred_region
      %s167 = ssub.s32 %s20, 1
      %s168 = smul.u32 3, %s30
      %p169 = scmp.lt.s32.totalorder %s29, 3
      %s170 = scalar_select %p169, %s29, 3
      %p171 = scmp.lt.s32.totalorder %s168, 2
      %s172 = scalar_select %p171, %s168, 2
      %s173 = smul.addr %s170, 3
      %s174 = sadd.s32 %s172, %s173
      %s175 = smul.addr %s174, 8
      %s176 = scalar_lea.vmem %s2, %s175
      %p177 = pneg %p60
      %p178 = pneg %p57
      %s179 = smul.u32 3, %s30
      %p180 = scmp.lt.s32.totalorder %s29, 3
      %s181 = scalar_select %p180, %s29, 3
      %p182 = scmp.lt.s32.totalorder %s179, 2
      %s183 = scalar_select %p182, %s179, 2
      %s184 = smul.addr %s181, 3
      %s185 = sadd.s32 %s183, %s184
      %s186 = smul.addr %s185, 8
      %s187 = scalar_lea.vmem %s3, %s186
      %p188 = pneg %p88
      %p189 = pneg %p85
      %p190 = pneg %p116
      %p191 = pneg %p113
      %s192 = smul.u32 3, %s30
      %p193 = scmp.lt.s32.totalorder %s29, 3
      %s194 = scalar_select %p193, %s29, 3
      %p195 = scmp.lt.s32.totalorder %s192, 2
      %s196 = scalar_select %p195, %s192, 2
      %s197 = smul.addr %s194, 3
      %s198 = sadd.s32 %s196, %s197
      %s199 = smul.addr %s198, 8
      %s200 = scalar_lea.vmem %s4, %s199
      %s201 = smul.u32 3, %s30
      %p202 = scmp.lt.s32.totalorder %s29, 3
      %s203 = scalar_select %p202, %s29, 3
      %p204 = scmp.lt.s32.totalorder %s201, 2
      %s205 = scalar_select %p204, %s201, 2
      %s206 = smul.addr %s203, 3
      %s207 = sadd.s32 %s205, %s206
      %s208 = smul.addr %s207, 8
      %s209 = scalar_lea.vmem %s2, %s208
      %s210 = smul.u32 3, %s30
      %s211 = smul.u32 3, %s30
      %p212 = scmp.lt.s32.totalorder %s29, 3
      %s213 = scalar_select %p212, %s29, 3
      %p214 = scmp.lt.s32.totalorder %s211, 2
      %s215 = scalar_select %p214, %s211, 2
      %s216 = smul.addr %s213, 3
      %s217 = sadd.s32 %s215, %s216
      %s218 = smul.addr %s217, 8
      %s219 = scalar_lea.vmem %s3, %s218
      %s220 = smul.u32 3, %s30
      %s221 = smul.u32 3, %s30
      %p222 = scmp.lt.s32.totalorder %s29, 3
      %s223 = scalar_select %p222, %s29, 3
      %p224 = scmp.lt.s32.totalorder %s221, 2
      %s225 = scalar_select %p224, %s221, 2
      %s226 = smul.addr %s223, 3
      %s227 = sadd.s32 %s225, %s226
      %s228 = smul.addr %s227, 8
      %s229 = scalar_lea.vmem %s4, %s228
      %s230 = smul.u32 3, %s30
      %s231 = sld [smem:[#allocation3 + %s29]]
      %v232 = vld [vmem:[%s209] sm:$0xff]
      %v233 = vld [vmem:[%s209 + $0x8] sm:$0xff]
      %v234 = vld [vmem:[%s209 + $0x10] sm:$0xff]
      %v235 = vstv %s231
      %v236 = vmul.f32 %v235, %v232
      %v237 = vmul.f32 %v235, %v233
      %v238 = vmul.f32 %v235, %v234
      %s239 = sld [smem:[#allocation4 + %s29]]
      %v240 = vld [vmem:[%s219] sm:$0xff]
      %v241 = vld [vmem:[%s219 + $0x8] sm:$0xff]
      %v242 = vld [vmem:[%s219 + $0x10] sm:$0xff]
      %v243 = vstv %s239
      %v244 = vmul.f32 %v243, %v240
      %v245 = vmul.f32 %v243, %v241
      %v246 = vmul.f32 %v243, %v242
      %v247 = vadd.f32 %v236, %v244
      %v248 = vadd.f32 %v237, %v245
      %v249 = vadd.f32 %v238, %v246
      %250 = vst [vmem:[%s229] sm:$0xff] %v247
      %251 = vst [vmem:[%s229 + $0x8] sm:$0xff] %v248
      %252 = vst [vmem:[%s229 + $0x10] sm:$0xff] %v249
      %s253 = smul.u32 3, %s30
      %p254 = scmp.lt.s32.totalorder %s29, 3
      %s255 = scalar_select %p254, %s29, 3
      %p256 = scmp.lt.s32.totalorder %s253, 2
      %s257 = scalar_select %p256, %s253, 2
      %s258 = smul.addr %s255, 3
      %s259 = sadd.s32 %s257, %s258
      %s260 = smul.addr %s259, 8
      %s261 = scalar_lea.vmem %s4, %s260
      // Predicated region
      $region29: #{if_loss_single_pass.4} parent=27 // pred_check
        %p262 = pneg %p113
      $region30: #{if_loss_single_pass.4} parent=27 // pred_check_branch
        %264 = sbr.rel (%p262) target = $region32
      $region31: #{if_loss_single_pass.4} parent=27 // pred_region
        %s265 = smul.u32 3, %s30
      $region32: #{if_loss_single_pass.4} parent=27 // pred_fallthru
        _
    $region28: #{if_loss_single_pass.4} parent=5 // pred_fallthru
      _
    %p266 = scmp.le.s32.totalorder 2, %s20
    // Predicated region
    $region33: #{if_loss_single_pass.4} parent=5 // pred_check
      %p267 = pneg %p266
    $region34: #{if_loss_single_pass.4} parent=5 // pred_check_branch
      %269 = sbr.rel (%p267) target = $region36
    $region35: #{if_loss_single_pass.4} parent=5 // pred_region
      %s270 = ssub.s32 %s20, 2
      // Predicated region
      $region37: #{if_loss_single_pass.4} parent=35 // pred_check
        %p271 = pneg %p119
      $region38: #{if_loss_single_pass.4} parent=35 // pred_check_branch
        %273 = sbr.rel (%p271) target = $region40
      $region39: #{if_loss_single_pass.4} parent=35 // pred_region
        %s274 = smul.u32 3, %s32
        %p275 = scmp.lt.s32.totalorder %s31, 3
        %s276 = scalar_select %p275, %s31, 3
        %p277 = scmp.lt.s32.totalorder %s274, 2
        %s278 = scalar_select %p277, %s274, 2
        %s279 = smul.addr %s276, 3
        %s280 = sadd.s32 %s278, %s279
        %s281 = smul.addr %s280, 8
        %s282 = scalar_lea.vmem %s4, %s281
      $region40: #{if_loss_single_pass.4} parent=35 // pred_fallthru
        _
    $region36: #{if_loss_single_pass.4} parent=5 // pred_fallthru
      _
  $region6: #{if_loss_single_pass.4} parent=0 // loop_footer
    %s24 = sadd.s32 1, %s20
  $region7: #{if_loss_single_pass.4} parent=0 // loop_footer_branch
    %19 = sbr.rel target = $region3
  $region8: #{if_loss_single_pass.4} parent=0 // loop_exit
    _

// kernel: if_loss_single_pass.5
$region0: #{if_loss_single_pass.5}
  #allocation0 [shape = 'u32[]', space=smem, size = 0x4, offset = 0x4, fixed_abs, tag = 'smem constant byte address 0x4 - core index']
  #allocation1 [shape = 'u32[144,128]{1,0:T(1,128)}', space=vmem, size = 0x12000, scoped, tag = 'internal scratch']
  #allocation2 [shape = 's32[1]{0}', space=sflag, size = 0x4, scoped, tag = 'scoped memory for if_loss_single_pass.5']
  #allocation3 [shape = 'u8[512]{0}', space=smem, size = 0x200, scoped, tag = 'prefetched SMEM operand 0']
  %s0 = inlined_call_operand.vmem [shape: f32[4], index: 0, kind: input, shape index: {}]
  %s1 = inlined_call_operand.vmem [shape: f32[8,2,24,128], index: 1, kind: input, shape index: {}, may-alias: {1,2}]
  %s2 = inlined_call_operand.vmem [shape: f32[8,2,24,128], index: 2, kind: input, shape index: {}, may-alias: {1,2}]
  %s3 = inlined_call_operand.vmem [shape: f32[4,24,128], index: 3, kind: input, shape index: {}]
  %s4 = inlined_call_operand.vmem [shape: f32[4,24,128], index: 4, kind: input, shape index: {}]
  %s5 = inlined_call_operand.vmem [shape: f32[2,8,128], index: 5, kind: output, shape index: {}]
  %s6 = sld [smem:[#allocation0]]
  $region53: #{if_loss_single_pass.5} parent=0
    _
  %s8 = ssub.s32 1, %s6
  %s9 = scalar_select 0, %s8, %s6
  %s10 = sshll.u32 %s0, 4
  %s11 = int_to_ptr.vmem [resolvable:$true] %s10
  %13 = dma.vmem_to_smem %s11, 16, [#allocation3], [#allocation2]
  %14 = dma.done [#allocation2], 16
  %15 = sfence
  loop: start=0, step=1, limit=6
  $region2: #{if_loss_single_pass.5} parent=0 // loop_pre_header
    _
  $region3: #{if_loss_single_pass.5} parent=0 // loop_header
    %s17 = sphi 0, %s21
    %p18 = scmp.ge.s32.totalorder %s17, 6
    %s24 = sphi 0, %s43
    %s25 = sphi 0, %s39
    %s26 = sphi 0, %s35
    %s27 = sphi 0, %s24
    %s28 = sphi 0, %s25
    %s29 = sphi 0, %s26
    %s30 = sphi 0, %s27
    %s31 = sphi 0, %s28
    %s32 = sphi 0, %s29
    %s52 = sphi 0, %s54
    %s55 = sphi 0, %s52
    %s56 = sphi 0, %s55
    %s72 = sphi 0, %s56
    %s86 = sphi 0, %s88
    %s89 = sphi 0, %s86
    %s90 = sphi 0, %s89
    %s106 = sphi 0, %s90
    %s118 = sphi 0, %s120
    %s121 = sphi 0, %s118
    %s122 = sphi 0, %s121
    %s138 = sphi 0, %s122
    %s150 = sphi 0, %s152
    %s153 = sphi 0, %s150
    %s154 = sphi 0, %s153
    %s170 = sphi 0, %s154
    %s176 = sphi 0, %s178
    %s179 = sphi 0, %s176
    %s180 = sphi 0, %s179
    %s196 = sphi 0, %s180
  $region4: #{if_loss_single_pass.5} parent=0 // loop_header_branch
    %20 = sbr.rel (%p18) target = $region8
  $region5: #{if_loss_single_pass.5} parent=0 // loop_body
    %s22 = ssub.s32 %s17, 1
    %s23 = ssub.s32 %s17, 2
    %s33 = sadd.s32 1, %s26
    %p34 = scmp.ge.s32.totalorder %s33, 1
    %s35 = scalar_select %p34, 0, %s33
    %s36 = sadd.s32 1, %s25
    %s37 = scalar_select %p34, %s36, %s25
    %p38 = scmp.ge.s32.totalorder %s37, 2
    %s39 = scalar_select %p38, 0, %s37
    %s40 = sadd.s32 1, %s24
    %s41 = scalar_select %p38, %s40, %s24
    %p42 = scmp.ge.s32.totalorder %s41, 2
    %s43 = scalar_select %p42, 0, %s41
    %s44 = smul.u32 %s24, 4
    %s45 = sadd.s32 %s44, %s25
    %s46 = smul.u32 %s43, 4
    %s47 = sadd.s32 %s46, %s39
    %s48 = ssub.s32 %s45, %s47
    %s49 = ssub.s32 %s26, %s35
    %s50 = sor.u32 %s48, %s49
    %p51 = scmp.eq.s32.totalorder %s50, 0
    %s53 = sadd.s32 %s52, 1
    %s54 = scalar_select %p51, %s52, %s53
    %p57 = pneg %p51
    %p58 = scmp.eq.s32.totalorder %s17, 3
    %p59 = por %p57, %p58
    %p60 = scmp.ne.s32.totalorder %s52, %s55
    %p61 = scmp.eq.s32.totalorder %s17, 0
    %p62 = por %p60, %p61
    %p63 = scmp.ne.s32.totalorder %s52, %s55
    %p64 = scmp.eq.s32.totalorder %s22, 3
    %p65 = por %p63, %p64
    %p66 = scmp.ne.s32.totalorder %s55, %s56
    %p67 = scmp.eq.s32.totalorder %s22, 0
    %p68 = por %p66, %p67
    %p69 = scmp.ne.s32.totalorder %s55, %s56
    %p70 = scmp.eq.s32.totalorder %s23, 3
    %p71 = por %p69, %p70
    %p73 = scmp.ne.s32.totalorder %s56, %s72
    %p74 = scmp.eq.s32.totalorder %s23, 0
    %p75 = por %p73, %p74
    %s76 = smul.u32 %s24, 4
    %s77 = sadd.s32 %s76, 2
    %s78 = sadd.s32 %s77, %s25
    %s79 = smul.u32 %s43, 4
    %s80 = sadd.s32 %s79, 2
    %s81 = sadd.s32 %s80, %s39
    %s82 = ssub.s32 %s78, %s81
    %s83 = ssub.s32 %s26, %s35
    %s84 = sor.u32 %s82, %s83
    %p85 = scmp.eq.s32.totalorder %s84, 0
    %s87 = sadd.s32 %s86, 1
    %s88 = scalar_select %p85, %s86, %s87
    %p91 = pneg %p85
    %p92 = scmp.eq.s32.totalorder %s17, 3
    %p93 = por %p91, %p92
    %p94 = scmp.ne.s32.totalorder %s86, %s89
    %p95 = scmp.eq.s32.totalorder %s17, 0
    %p96 = por %p94, %p95
    %p97 = scmp.ne.s32.totalorder %s86, %s89
    %p98 = scmp.eq.s32.totalorder %s22, 3
    %p99 = por %p97, %p98
    %p100 = scmp.ne.s32.totalorder %s89, %s90
    %p101 = scmp.eq.s32.totalorder %s22, 0
    %p102 = por %p100, %p101
    %p103 = scmp.ne.s32.totalorder %s89, %s90
    %p104 = scmp.eq.s32.totalorder %s23, 3
    %p105 = por %p103, %p104
    %p107 = scmp.ne.s32.totalorder %s90, %s106
    %p108 = scmp.eq.s32.totalorder %s23, 0
    %p109 = por %p107, %p108
    %s110 = smul.u32 %s24, 2
    %s111 = sadd.s32 %s110, %s25
    %s112 = smul.u32 %s43, 2
    %s113 = sadd.s32 %s112, %s39
    %s114 = ssub.s32 %s111, %s113
    %s115 = ssub.s32 %s26, %s35
    %s116 = sor.u32 %s114, %s115
    %p117 = scmp.eq.s32.totalorder %s116, 0
    %s119 = sadd.s32 %s118, 1
    %s120 = scalar_select %p117, %s118, %s119
    %p123 = pneg %p117
    %p124 = scmp.eq.s32.totalorder %s17, 3
    %p125 = por %p123, %p124
    %p126 = scmp.ne.s32.totalorder %s118, %s121
    %p127 = scmp.eq.s32.totalorder %s17, 0
    %p128 = por %p126, %p127
    %p129 = scmp.ne.s32.totalorder %s118, %s121
    %p130 = scmp.eq.s32.totalorder %s22, 3
    %p131 = por %p129, %p130
    %p132 = scmp.ne.s32.totalorder %s121, %s122
    %p133 = scmp.eq.s32.totalorder %s22, 0
    %p134 = por %p132, %p133
    %p135 = scmp.ne.s32.totalorder %s121, %s122
    %p136 = scmp.eq.s32.totalorder %s23, 3
    %p137 = por %p135, %p136
    %p139 = scmp.ne.s32.totalorder %s122, %s138
    %p140 = scmp.eq.s32.totalorder %s23, 0
    %p141 = por %p139, %p140
    %s142 = smul.u32 %s24, 2
    %s143 = sadd.s32 %s142, %s25
    %s144 = smul.u32 %s43, 2
    %s145 = sadd.s32 %s144, %s39
    %s146 = ssub.s32 %s143, %s145
    %s147 = ssub.s32 %s26, %s35
    %s148 = sor.u32 %s146, %s147
    %p149 = scmp.eq.s32.totalorder %s148, 0
    %s151 = sadd.s32 %s150, 1
    %s152 = scalar_select %p149, %s150, %s151
    %p155 = pneg %p149
    %p156 = scmp.eq.s32.totalorder %s17, 3
    %p157 = por %p155, %p156
    %p158 = scmp.ne.s32.totalorder %s150, %s153
    %p159 = scmp.eq.s32.totalorder %s17, 0
    %p160 = por %p158, %p159
    %p161 = scmp.ne.s32.totalorder %s150, %s153
    %p162 = scmp.eq.s32.totalorder %s22, 3
    %p163 = por %p161, %p162
    %p164 = scmp.ne.s32.totalorder %s153, %s154
    %p165 = scmp.eq.s32.totalorder %s22, 0
    %p166 = por %p164, %p165
    %p167 = scmp.ne.s32.totalorder %s153, %s154
    %p168 = scmp.eq.s32.totalorder %s23, 3
    %p169 = por %p167, %p168
    %p171 = scmp.ne.s32.totalorder %s154, %s170
    %p172 = scmp.eq.s32.totalorder %s23, 0
    %p173 = por %p171, %p172
    %s174 = ssub.s32 %s24, %s43
    %p175 = scmp.eq.s32.totalorder %s174, 0
    %s177 = sadd.s32 %s176, 1
    %s178 = scalar_select %p175, %s176, %s177
    %p181 = pneg %p175
    %p182 = scmp.eq.s32.totalorder %s17, 3
    %p183 = por %p181, %p182
    %p184 = scmp.ne.s32.totalorder %s176, %s179
    %p185 = scmp.eq.s32.totalorder %s17, 0
    %p186 = por %p184, %p185
    %p187 = scmp.ne.s32.totalorder %s176, %s179
    %p188 = scmp.eq.s32.totalorder %s22, 3
    %p189 = por %p187, %p188
    %p190 = scmp.ne.s32.totalorder %s179, %s180
    %p191 = scmp.eq.s32.totalorder %s22, 0
    %p192 = por %p190, %p191
    %p193 = scmp.ne.s32.totalorder %s179, %s180
    %p194 = scmp.eq.s32.totalorder %s23, 3
    %p195 = por %p193, %p194
    %p197 = scmp.ne.s32.totalorder %s180, %s196
    %p198 = scmp.eq.s32.totalorder %s23, 0
    %p199 = por %p197, %p198
    %p200 = scmp.le.s32.totalorder 1, %s17
    %p201 = scmp.lt.s32.totalorder %s17, 5
    %p202 = pnand %p200, %p201
    %p203 = pneg %p202
    // Predicated region
    $region9: #{if_loss_single_pass.5} parent=5 // pred_check
      _
    $region10: #{if_loss_single_pass.5} parent=5 // pred_check_branch
      %205 = sbr.rel (%p202) target = $region12
    $region11: #{if_loss_single_pass.5} parent=5 // pred_region
      %s206 = ssub.s32 %s17, 1
    $region12: #{if_loss_single_pass.5} parent=5 // pred_fallthru
      _
    %p207 = scmp.lt.s32.totalorder %s17, 4
    // Predicated region
    $region13: #{if_loss_single_pass.5} parent=5 // pred_check
      %p208 = pneg %p207
    $region14: #{if_loss_single_pass.5} parent=5 // pred_check_branch
      %210 = sbr.rel (%p208) target = $region16
    $region15: #{if_loss_single_pass.5} parent=5 // pred_region
      // Predicated region
      $region17: #{if_loss_single_pass.5} parent=15 // pred_check
        %p211 = pneg %p62
      $region18: #{if_loss_single_pass.5} parent=15 // pred_check_branch
        %213 = sbr.rel (%p211) target = $region20
      $region19: #{if_loss_single_pass.5} parent=15 // pred_region
        %s214 = smul.u32 %s24, 4
        %s215 = sadd.s32 %s214, %s25
        %s216 = smul.u32 3, %s26
        %p217 = scmp.lt.s32.totalorder %s215, 7
        %s218 = scalar_select %p217, %s215, 7
        %p219 = scmp.lt.s32.totalorder %s216, 2
        %s220 = scalar_select %p219, %s216, 2
        %s221 = smul.addr %s218, 6
        %s222 = sadd.s32 %s220, %s221
        %s223 = smul.addr %s222, 8
        %s224 = scalar_lea.vmem %s1, %s223
        %s225 = smul.u32 %s24, 4
        %s226 = sadd.s32 %s225, %s25
        %s227 = smul.u32 3, %s26
      $region20: #{if_loss_single_pass.5} parent=15 // pred_fallthru
        _
      // Predicated region
      $region21: #{if_loss_single_pass.5} parent=15 // pred_check
        %p228 = pneg %p96
      $region22: #{if_loss_single_pass.5} parent=15 // pred_check_branch
        %230 = sbr.rel (%p228) target = $region24
      $region23: #{if_loss_single_pass.5} parent=15 // pred_region
        %s231 = smul.u32 %s24, 4
        %s232 = sadd.s32 %s231, 2
        %s233 = sadd.s32 %s232, %s25
        %s234 = smul.u32 3, %s26
        %p235 = scmp.lt.s32.totalorder %s233, 7
        %s236 = scalar_select %p235, %s233, 7
        %p237 = scmp.lt.s32.totalorder %s234, 2
        %s238 = scalar_select %p237, %s234, 2
        %s239 = smul.addr %s236, 6
        %s240 = sadd.s32 %s238, %s239
        %s241 = smul.addr %s240, 8
        %s242 = scalar_lea.vmem %s2, %s241
        %s243 = smul.u32 %s24, 4
        %s244 = sadd.s32 %s243, 2
        %s245 = sadd.s32 %s244, %s25
        %s246 = smul.u32 3, %s26
      $region24: #{if_loss_single_pass.5} parent=15 // pred_fallthru
        _
      // Predicated region
      $region25: #{if_loss_single_pass.5} parent=15 // pred_check
        %p247 = pneg %p128
      $region26: #{if_loss_single_pass.5} parent=15 // pred_check_branch
        %249 = sbr.rel (%p247) target = $region28
      $region27: #{if_loss_single_pass.5} parent=15 // pred_region
        %s250 = smul.u32 %s24, 2
        %s251 = sadd.s32 %s250, %s25
        %s252 = smul.u32 3, %s26
        %p253 = scmp.lt.s32.totalorder %s251, 3
        %s254 = scalar_select %p253, %s251, 3
        %p255 = scmp.lt.s32.totalorder %s252, 2
        %s256 = scalar_select %p255, %s252, 2
        %s257 = smul.addr %s254, 3
        %s258 = sadd.s32 %s256, %s257
        %s259 = smul.addr %s258, 8
        %s260 = scalar_lea.vmem %s3, %s259
        %s261 = smul.u32 %s24, 2
        %s262 = sadd.s32 %s261, %s25
        %s263 = smul.u32 3, %s26
      $region28: #{if_loss_single_pass.5} parent=15 // pred_fallthru
        _
      // Predicated region
      $region29: #{if_loss_single_pass.5} parent=15 // pred_check
        %p264 = pneg %p160
      $region30: #{if_loss_single_pass.5} parent=15 // pred_check_branch
        %266 = sbr.rel (%p264) target = $region32
      $region31: #{if_loss_single_pass.5} parent=15 // pred_region
        %s267 = smul.u32 %s24, 2
        %s268 = sadd.s32 %s267, %s25
        %s269 = smul.u32 3, %s26
        %p270 = scmp.lt.s32.totalorder %s268, 3
        %s271 = scalar_select %p270, %s268, 3
        %p272 = scmp.lt.s32.totalorder %s269, 2
        %s273 = scalar_select %p272, %s269, 2
        %s274 = smul.addr %s271, 3
        %s275 = sadd.s32 %s273, %s274
        %s276 = smul.addr %s275, 8
        %s277 = scalar_lea.vmem %s4, %s276
        %s278 = smul.u32 %s24, 2
        %s279 = sadd.s32 %s278, %s25
        %s280 = smul.u32 3, %s26
      $region32: #{if_loss_single_pass.5} parent=15 // pred_fallthru
        _
    $region16: #{if_loss_single_pass.5} parent=5 // pred_fallthru
      _
    %p281 = scmp.le.s32.totalorder 1, %s17
    %p282 = scmp.lt.s32.totalorder %s17, 5
    %p283 = pnand %p281, %p282
    %p284 = pneg %p283
    // Predicated region
    $region33: #{if_loss_single_pass.5} parent=5 // pred_check
      _
    $region34: #{if_loss_single_pass.5} parent=5 // pred_check_branch
      %286 = sbr.rel (%p283) target = $region36
    $region35: #{if_loss_single_pass.5} parent=5 // pred_region
      %s287 = ssub.s32 %s17, 1
      %s288 = smul.u32 %s27, 4
      %s289 = sadd.s32 %s288, %s28
      %s290 = smul.u32 3, %s29
      %p291 = scmp.lt.s32.totalorder %s289, 7
      %s292 = scalar_select %p291, %s289, 7
      %p293 = scmp.lt.s32.totalorder %s290, 2
      %s294 = scalar_select %p293, %s290, 2
      %s295 = smul.addr %s292, 6
      %s296 = sadd.s32 %s294, %s295
      %s297 = smul.addr %s296, 8
      %s298 = scalar_lea.vmem %s1, %s297
      %p299 = pneg %p68
      %p300 = pneg %p65
      %s301 = smul.u32 %s27, 4
      %s302 = sadd.s32 %s301, 2
      %s303 = sadd.s32 %s302, %s28
      %s304 = smul.u32 3, %s29
      %p305 = scmp.lt.s32.totalorder %s303, 7
      %s306 = scalar_select %p305, %s303, 7
      %p307 = scmp.lt.s32.totalorder %s304, 2
      %s308 = scalar_select %p307, %s304, 2
      %s309 = smul.addr %s306, 6
      %s310 = sadd.s32 %s308, %s309
      %s311 = smul.addr %s310, 8
      %s312 = scalar_lea.vmem %s2, %s311
      %p313 = pneg %p102
      %p314 = pneg %p99
      %s315 = smul.u32 %s27, 2
      %s316 = sadd.s32 %s315, %s28
      %s317 = smul.u32 3, %s29
      %p318 = scmp.lt.s32.totalorder %s316, 3
      %s319 = scalar_select %p318, %s316, 3
      %p320 = scmp.lt.s32.totalorder %s317, 2
      %s321 = scalar_select %p320, %s317, 2
      %s322 = smul.addr %s319, 3
      %s323 = sadd.s32 %s321, %s322
      %s324 = smul.addr %s323, 8
      %s325 = scalar_lea.vmem %s3, %s324
      %p326 = pneg %p134
      %p327 = pneg %p131
      %s328 = smul.u32 %s27, 2
      %s329 = sadd.s32 %s328, %s28
      %s330 = smul.u32 3, %s29
      %p331 = scmp.lt.s32.totalorder %s329, 3
      %s332 = scalar_select %p331, %s329, 3
      %p333 = scmp.lt.s32.totalorder %s330, 2
      %s334 = scalar_select %p333, %s330, 2
      %s335 = smul.addr %s332, 3
      %s336 = sadd.s32 %s334, %s335
      %s337 = smul.addr %s336, 8
      %s338 = scalar_lea.vmem %s4, %s337
      %p339 = pneg %p166
      %p340 = pneg %p163
      %p341 = pneg %p192
      %p342 = pneg %p189
      %p343 = scmp.lt.s32.totalorder %s27, 1
      %s344 = scalar_select %p343, %s27, 1
      %s345 = smul.addr %s344, 8
      %s346 = scalar_lea.vmem %s5, %s345
      %s347 = smul.u32 %s27, 4
      %s348 = sadd.s32 %s347, %s28
      %s349 = smul.u32 3, %s29
      %p350 = scmp.lt.s32.totalorder %s348, 7
      %s351 = scalar_select %p350, %s348, 7
      %p352 = scmp.lt.s32.totalorder %s349, 2
      %s353 = scalar_select %p352, %s349, 2
      %s354 = smul.addr %s351, 6
      %s355 = sadd.s32 %s353, %s354
      %s356 = smul.addr %s355, 8
      %s357 = scalar_lea.vmem %s1, %s356
      %s358 = smul.u32 %s27, 4
      %s359 = sadd.s32 %s358, %s28
      %s360 = smul.u32 3, %s29
      %s361 = smul.u32 %s27, 4
      %s362 = sadd.s32 %s361, 2
      %s363 = sadd.s32 %s362, %s28
      %s364 = smul.u32 3, %s29
      %p365 = scmp.lt.s32.totalorder %s363, 7
      %s366 = scalar_select %p365, %s363, 7
      %p367 = scmp.lt.s32.totalorder %s364, 2
      %s368 = scalar_select %p367, %s364, 2
      %s369 = smul.addr %s366, 6
      %s370 = sadd.s32 %s368, %s369
      %s371 = smul.addr %s370, 8
      %s372 = scalar_lea.vmem %s2, %s371
      %s373 = smul.u32 %s27, 4
      %s374 = sadd.s32 %s373, 2
      %s375 = sadd.s32 %s374, %s28
      %s376 = smul.u32 3, %s29
      %s377 = smul.u32 %s27, 2
      %s378 = sadd.s32 %s377, %s28
      %s379 = smul.u32 3, %s29
      %p380 = scmp.lt.s32.totalorder %s378, 3
      %s381 = scalar_select %p380, %s378, 3
      %p382 = scmp.lt.s32.totalorder %s379, 2
      %s383 = scalar_select %p382, %s379, 2
      %s384 = smul.addr %s381, 3
      %s385 = sadd.s32 %s383, %s384
      %s386 = smul.addr %s385, 8
      %s387 = scalar_lea.vmem %s3, %s386
      %s388 = smul.u32 %s27, 2
      %s389 = sadd.s32 %s388, %s28
      %s390 = smul.u32 3, %s29
      %s391 = smul.u32 %s27, 2
      %s392 = sadd.s32 %s391, %s28
      %s393 = smul.u32 3, %s29
      %p394 = scmp.lt.s32.totalorder %s392, 3
      %s395 = scalar_select %p394, %s392, 3
      %p396 = scmp.lt.s32.totalorder %s393, 2
      %s397 = scalar_select %p396, %s393, 2
      %s398 = smul.addr %s395, 3
      %s399 = sadd.s32 %s397, %s398
      %s400 = smul.addr %s399, 8
      %s401 = scalar_lea.vmem %s4, %s400
      %s402 = smul.u32 %s27, 2
      %s403 = sadd.s32 %s402, %s28
      %s404 = smul.u32 3, %s29
      %p405 = scmp.lt.s32.totalorder %s27, 1
      %s406 = scalar_select %p405, %s27, 1
      %s407 = smul.addr %s406, 8
      %s408 = scalar_lea.vmem %s5, %s407
      %p409 = scmp.eq.s32.totalorder %s28, 0
      %p410 = scmp.eq.s32.totalorder %s29, 0
      %p411 = pnand %p409, %p410
      %p412 = pneg %p411
      // Predicated region
      $region37: #{if_loss_single_pass.5} parent=35 // pred_check
        _
      $region38: #{if_loss_single_pass.5} parent=35 // pred_check_branch
        %414 = sbr.rel (%p411) target = $region40
      $region39: #{if_loss_single_pass.5} parent=35 // pred_region
        %415 = vst [vmem:[%s408] sm:$0xff] 0.0
      $region40: #{if_loss_single_pass.5} parent=35 // pred_fallthru
        _
      %v416 = vld [vmem:[%s357] sm:$0xff]
      %v417 = vld [vmem:[%s357 + $0x8] sm:$0xff]
      %v418 = vld [vmem:[%s357 + $0x10] sm:$0xff]
      %v419 = vld [vmem:[%s372] sm:$0xff]
      %v420 = vld [vmem:[%s372 + $0x8] sm:$0xff]
      %v421 = vld [vmem:[%s372 + $0x10] sm:$0xff]
      %v422 = vsub.f32 %v419, %v416
      %v423 = vsub.f32 %v420, %v417
      %v424 = vsub.f32 %v421, %v418
      %v425 = vmul.f32 %v422, 100.0
      %v426 = vmul.f32 %v423, 100.0
      %v427 = vmul.f32 %v424, 100.0
      %v428 = vadd.f32 %v416, %v425
      %v429 = vadd.f32 %v417, %v426
      %v430 = vadd.f32 %v418, %v427
      %v431 = vld [vmem:[%s387] sm:$0xff]
      %v432 = vld [vmem:[%s387 + $0x8] sm:$0xff]
      %v433 = vld [vmem:[%s387 + $0x10] sm:$0xff]
      %v434 = vsub.f32 %v428, %v431
      %v435 = vsub.f32 %v429, %v432
      %v436 = vsub.f32 %v430, %v433
      %vm437 = vweird.f32 %v434
      %vm438 = vweird.f32 %v435
      %vm439 = vweird.f32 %v436
      %vm440 = vmxor %vm437, 1
      %vm441 = vmxor %vm438, 1
      %vm442 = vmxor %vm439, 1
      %v443 = vsel %vm440, %v434, 0.0
      %v444 = vsel %vm441, %v435, 0.0
      %v445 = vsel %vm442, %v436, 0.0
      %v446 = vld [vmem:[%s401] sm:$0xff]
      %v447 = vld [vmem:[%s401 + $0x8] sm:$0xff]
      %v448 = vld [vmem:[%s401 + $0x10] sm:$0xff]
      %v449 = vmul.f32 %v443, %v446
      %v450 = vmul.f32 %v444, %v447
      %v451 = vmul.f32 %v445, %v448
      %v452 = vadd.f32 %v449, %v450
      %v453 = vadd.f32 %v452, %v451
      %s454 = smul.u32 %s27, 2
      %s455 = sadd.s32 %s454, %s28
      %s456 = sld [smem:[#allocation3 + %s455]]
      %v457 = vld [vmem:[%s408] sm:$0xff]
      %v458 = vstv %s456
      %v459 = vmul.f32 %v458, %v453
      %v460 = vadd.f32 %v457, %v459
      %461 = vst [vmem:[%s408] sm:$0xff] %v460
      %p462 = scmp.lt.s32.totalorder %s27, 1
      %s463 = scalar_select %p462, %s27, 1
      %s464 = smul.addr %s463, 8
      %s465 = scalar_lea.vmem %s5, %s464
      // Predicated region
      $region41: #{if_loss_single_pass.5} parent=35 // pred_check
        %p466 = pneg %p189
      $region42: #{if_loss_single_pass.5} parent=35 // pred_check_branch
        %468 = sbr.rel (%p466) target = $region44
      $region43: #{if_loss_single_pass.5} parent=35 // pred_region
        _
      $region44: #{if_loss_single_pass.5} parent=35 // pred_fallthru
        _
    $region36: #{if_loss_single_pass.5} parent=5 // pred_fallthru
      _
    %p469 = scmp.le.s32.totalorder 2, %s17
    // Predicated region
    $region45: #{if_loss_single_pass.5} parent=5 // pred_check
      %p470 = pneg %p469
    $region46: #{if_loss_single_pass.5} parent=5 // pred_check_branch
      %472 = sbr.rel (%p470) target = $region48
    $region47: #{if_loss_single_pass.5} parent=5 // pred_region
      %s473 = ssub.s32 %s17, 2
      // Predicated region
      $region49: #{if_loss_single_pass.5} parent=47 // pred_check
        %p474 = pneg %p195
      $region50: #{if_loss_single_pass.5} parent=47 // pred_check_branch
        %476 = sbr.rel (%p474) target = $region52
      $region51: #{if_loss_single_pass.5} parent=47 // pred_region
        %p477 = scmp.lt.s32.totalorder %s30, 1
        %s478 = scalar_select %p477, %s30, 1
        %s479 = smul.addr %s478, 8
        %s480 = scalar_lea.vmem %s5, %s479
      $region52: #{if_loss_single_pass.5} parent=47 // pred_fallthru
        _
    $region48: #{if_loss_single_pass.5} parent=5 // pred_fallthru
      _
  $region6: #{if_loss_single_pass.5} parent=0 // loop_footer
    %s21 = sadd.s32 1, %s17
  $region7: #{if_loss_single_pass.5} parent=0 // loop_footer_branch
    %16 = sbr.rel target = $region3
  $region8: #{if_loss_single_pass.5} parent=0 // loop_exit
    _

</llo_original>
